<compile_context>
chip_gen: v5e
topology: v5e:2x2
jax: 0.10.0
libtpu: 0.0.40
codegen_flags: <defaults>
</compile_context>

<pallas_src>
import math
import jax
import jax.numpy as jnp
from jax.experimental import pallas as pl
from jax.experimental.pallas import tpu as pltpu


def merge_kernel(ne_ref, s1_ref, s2_ref, w_ne_ref, w_s1_ref, w_s2_ref, b_ref, o_ref):
    """One batch tile: fused (TB, 2H) pre-activation, then tanh * sigmoid gate."""
    H = o_ref.shape[-1]

    # x @ [W_m | W_g] expressed without materializing the concatenated x:
    # accumulate the three row-blocks of the packed weight in f32 on the MXU.
    acc = jnp.dot(ne_ref[...], w_ne_ref[...], preferred_element_type=jnp.float32)
    acc += jnp.dot(s1_ref[...], w_s1_ref[...], preferred_element_type=jnp.float32)
    acc += jnp.dot(s2_ref[...], w_s2_ref[...], preferred_element_type=jnp.float32)
    acc += b_ref[...]  # (1, 2H) broadcast over rows

    h = jnp.tanh(acc[:, :H])          # "merge" half
    g = jax.nn.sigmoid(acc[:, H:])    # "merge_g" half
    o_ref[...] = (h * g).astype(o_ref.dtype)


def merge_forward(node_embedding, sub_tree_1, sub_tree_2, params, *, block_b=512):
    """node_embedding: (B, E); sub_tree_1/2: (B, H) -> (B, H).

    params["w"] is the packed weight (D_in, 2H) = [W_m^T | W_g^T],
    params["b"] is the packed bias   (1, 2H)   = [b_m | b_g].
    """
    # TODO(synk): training-mode Dropout(0.5) omitted; eval (identity) semantics used.
    B, E = node_embedding.shape
    H = sub_tree_1.shape[1]
    w = params["w"]            # (E + 2H, 2H)
    b = params["b"]            # (1, 2H)
    H2 = w.shape[1]
    assert H2 == 2 * H

    # Static row-slices of the packed weight (trace-time; no runtime concat of x).
    w_ne = w[:E]               # (E, 2H)
    w_s1 = w[E:E + H]          # (H, 2H)
    w_s2 = w[E + H:]           # (H, 2H)

    # Batch tiling: many tree-node Merge calls per pallas_call.
    TB = min(block_b, B)
    num_blocks = pl.cdiv(B, TB)
    Bp = num_blocks * TB
    if Bp != B:
        pad = ((0, Bp - B), (0, 0))
        node_embedding = jnp.pad(node_embedding, pad)
        sub_tree_1 = jnp.pad(sub_tree_1, pad)
        sub_tree_2 = jnp.pad(sub_tree_2, pad)

    batch_spec = lambda cols: pl.BlockSpec((TB, cols), lambda i: (i, 0))
    resident = lambda r, c: pl.BlockSpec((r, c), lambda i: (0, 0))

    out = pl.pallas_call(
        merge_kernel,
        out_shape=jax.ShapeDtypeStruct((Bp, H), node_embedding.dtype),
        grid=(num_blocks,),
        in_specs=[
            batch_spec(E),          # node_embedding tile
            batch_spec(H),          # sub_tree_1 tile
            batch_spec(H),          # sub_tree_2 tile
            resident(E, H2),        # W rows for node_embedding (resident)
            resident(H, H2),        # W rows for sub_tree_1     (resident)
            resident(H, H2),        # W rows for sub_tree_2     (resident)
            resident(1, H2),        # packed bias               (resident)
        ],
        out_specs=batch_spec(H),
        compiler_params=pltpu.CompilerParams(
            dimension_semantics=("parallel",),  # shards batch tiles across TCs on v7x
        ),
    )(node_embedding, sub_tree_1, sub_tree_2, w_ne, w_s1, w_s2, b)

    return out[:B] if Bp != B else out


def init_params(key, hidden_size, embedding_size, dtype=jnp.float32):
    """Deterministic init mirroring nn.Linear default U(-1/sqrt(fan_in), 1/sqrt(fan_in)).

    Weights are packed column-wise: w = [W_m^T | W_g^T] of shape (D_in, 2H),
    bias b = [b_m | b_g] of shape (1, 2H).
    """
    d_in = hidden_size * 2 + embedding_size
    bound = 1.0 / math.sqrt(d_in)
    k1, k2, k3, k4 = jax.random.split(key, 4)
    w_m = jax.random.uniform(k1, (d_in, hidden_size), dtype, -bound, bound)
    b_m = jax.random.uniform(k2, (1, hidden_size), dtype, -bound, bound)
    w_g = jax.random.uniform(k3, (d_in, hidden_size), dtype, -bound, bound)
    b_g = jax.random.uniform(k4, (1, hidden_size), dtype, -bound, bound)
    return {
        "w": jnp.concatenate([w_m, w_g], axis=1),   # (D_in, 2H)
        "b": jnp.concatenate([b_m, b_g], axis=1),   # (1, 2H)
    }


def merge_reference(node_embedding, sub_tree_1, sub_tree_2, params):
    H = sub_tree_1.shape[1]
    x = jnp.concatenate([node_embedding, sub_tree_1, sub_tree_2], axis=1)
    pre = x @ params["w"] + params["b"]
    return jnp.tanh(pre[:, :H]) * jax.nn.sigmoid(pre[:, H:])


if __name__ == "__main__":
    hidden_size = 32
    embedding_size = 32

    key = jax.random.PRNGKey(0)
    kp, k1, k2, k3 = jax.random.split(key, 4)
    params = init_params(kp, hidden_size, embedding_size)

    # Small, module-consistent shapes (single grid step).
    batch = 8
    node_embedding = jax.random.normal(k1, (batch, embedding_size), jnp.float32)
    sub_tree_1 = jax.random.normal(k2, (batch, hidden_size), jnp.float32)
    sub_tree_2 = jax.random.normal(k3, (batch, hidden_size), jnp.float32)

    out = merge_forward(node_embedding, sub_tree_1, sub_tree_2, params)
    out = jax.block_until_ready(out)
    ref = merge_reference(node_embedding, sub_tree_1, sub_tree_2, params)
    assert out.shape == (batch, hidden_size)
    assert jnp.allclose(out, ref, atol=1e-5, rtol=1e-5), "mismatch vs reference (small batch)"

    # Exercise the batched grid + padding path (grid > 1, ragged batch).
    batch2 = 272
    k4, k5, k6 = jax.random.split(jax.random.PRNGKey(1), 3)
    ne2 = jax.random.normal(k4, (batch2, embedding_size), jnp.float32)
    s1_2 = jax.random.normal(k5, (batch2, hidden_size), jnp.float32)
    s2_2 = jax.random.normal(k6, (batch2, hidden_size), jnp.float32)
    out2 = merge_forward(ne2, s1_2, s2_2, params, block_b=128)
    out2 = jax.block_until_ready(out2)
    ref2 = merge_reference(ne2, s1_2, s2_2, params)
    assert out2.shape == (batch2, hidden_size)
    assert jnp.allclose(out2, ref2, atol=1e-5, rtol=1e-5), "mismatch vs reference (tiled batch)"

    print("KERNEL_OK")
</pallas_src>

<mosaic_0001>
module attributes {stable_mosaic.version = 11 : i64} {
  func.func @merge_kernel(%arg0: i32, %arg1: memref<8x32xf32, #tpu.memory_space<vmem>>, %arg2: memref<8x32xf32, #tpu.memory_space<vmem>>, %arg3: memref<8x32xf32, #tpu.memory_space<vmem>>, %arg4: memref<32x64xf32, #tpu.memory_space<vmem>>, %arg5: memref<32x64xf32, #tpu.memory_space<vmem>>, %arg6: memref<32x64xf32, #tpu.memory_space<vmem>>, %arg7: memref<1x64xf32, #tpu.memory_space<vmem>>, %arg8: memref<8x32xf32, #tpu.memory_space<vmem>>) attributes {dimension_semantics = [#tpu.dimension_semantics<parallel>], iteration_bounds = array<i64: 1>, scalar_prefetch = 0 : i64, scratch_operands = 0 : i64, tpu.core_type = #tpu.core_type<tc>, window_params = [{transform_indices = @transform_0, window_bounds = array<i64: 8, 32>}, {transform_indices = @transform_1, window_bounds = array<i64: 8, 32>}, {transform_indices = @transform_2, window_bounds = array<i64: 8, 32>}, {pipeline_mode = #tpu.pipeline_mode<synchronous>, transform_indices = @transform_3, window_bounds = array<i64: 32, 64>}, {pipeline_mode = #tpu.pipeline_mode<synchronous>, transform_indices = @transform_4, window_bounds = array<i64: 32, 64>}, {pipeline_mode = #tpu.pipeline_mode<synchronous>, transform_indices = @transform_5, window_bounds = array<i64: 32, 64>}, {pipeline_mode = #tpu.pipeline_mode<synchronous>, transform_indices = @transform_6, window_bounds = array<i64: 1, 64>}, {transform_indices = @transform_7, window_bounds = array<i64: 8, 32>}]} {
    %c0 = arith.constant 0 : index
    %c0_0 = arith.constant 0 : index
    %0 = vector.load %arg1[%c0, %c0_0] : memref<8x32xf32, #tpu.memory_space<vmem>>, vector<8x32xf32>
    %c0_1 = arith.constant 0 : index
    %c0_2 = arith.constant 0 : index
    %1 = vector.load %arg4[%c0_1, %c0_2] : memref<32x64xf32, #tpu.memory_space<vmem>>, vector<32x64xf32>
    %cst = arith.constant dense<0.000000e+00> : vector<8x64xf32>
    %2 = tpu.matmul %0, %1, %cst {dimension_numbers = #tpu.dot_dimension_numbers<[1], [0], [0], [1], [0, 0, 1, 1], [], []>} : vector<8x32xf32>, vector<32x64xf32>, vector<8x64xf32> -> vector<8x64xf32>
    %c0_3 = arith.constant 0 : index
    %c0_4 = arith.constant 0 : index
    %3 = vector.load %arg2[%c0_3, %c0_4] : memref<8x32xf32, #tpu.memory_space<vmem>>, vector<8x32xf32>
    %c0_5 = arith.constant 0 : index
    %c0_6 = arith.constant 0 : index
    %4 = vector.load %arg5[%c0_5, %c0_6] : memref<32x64xf32, #tpu.memory_space<vmem>>, vector<32x64xf32>
    %cst_7 = arith.constant dense<0.000000e+00> : vector<8x64xf32>
    %5 = tpu.matmul %3, %4, %cst_7 {dimension_numbers = #tpu.dot_dimension_numbers<[1], [0], [0], [1], [0, 0, 1, 1], [], []>} : vector<8x32xf32>, vector<32x64xf32>, vector<8x64xf32> -> vector<8x64xf32>
    %6 = arith.addf %2, %5 : vector<8x64xf32>
    %c0_8 = arith.constant 0 : index
    %c0_9 = arith.constant 0 : index
    %7 = vector.load %arg3[%c0_8, %c0_9] : memref<8x32xf32, #tpu.memory_space<vmem>>, vector<8x32xf32>
    %c0_10 = arith.constant 0 : index
    %c0_11 = arith.constant 0 : index
    %8 = vector.load %arg6[%c0_10, %c0_11] : memref<32x64xf32, #tpu.memory_space<vmem>>, vector<32x64xf32>
    %cst_12 = arith.constant dense<0.000000e+00> : vector<8x64xf32>
    %9 = tpu.matmul %7, %8, %cst_12 {dimension_numbers = #tpu.dot_dimension_numbers<[1], [0], [0], [1], [0, 0, 1, 1], [], []>} : vector<8x32xf32>, vector<32x64xf32>, vector<8x64xf32> -> vector<8x64xf32>
    %10 = arith.addf %6, %9 : vector<8x64xf32>
    %c0_13 = arith.constant 0 : index
    %c0_14 = arith.constant 0 : index
    %11 = vector.load %arg7[%c0_13, %c0_14] : memref<1x64xf32, #tpu.memory_space<vmem>>, vector<1x64xf32>
    %12 = vector.broadcast %11 : vector<1x64xf32> to vector<8x64xf32>
    %13 = arith.addf %10, %12 : vector<8x64xf32>
    %14 = vector.extract_strided_slice %13 {offsets = [0, 0], sizes = [8, 32], strides = [1, 1]} : vector<8x64xf32> to vector<8x32xf32>
    %15 = math.tanh %14 : vector<8x32xf32>
    %16 = vector.extract_strided_slice %13 {offsets = [0, 32], sizes = [8, 32], strides = [1, 1]} : vector<8x64xf32> to vector<8x32xf32>
    %17 = arith.negf %16 : vector<8x32xf32>
    %18 = math.exp %17 : vector<8x32xf32>
    %cst_15 = arith.constant 1.000000e+00 : f32
    %19 = vector.broadcast %cst_15 : f32 to vector<8x32xf32>
    %20 = arith.addf %19, %18 : vector<8x32xf32>
    %21 = arith.divf %19, %20 : vector<8x32xf32>
    %22 = arith.mulf %15, %21 : vector<8x32xf32>
    %c0_16 = arith.constant 0 : index
    %c0_17 = arith.constant 0 : index
    %23 = vector.load %arg8[%c0_16, %c0_17] : memref<8x32xf32, #tpu.memory_space<vmem>>, vector<8x32xf32>
    tpu.vector_store %arg8[%c0_16, %c0_17], %22 {strides = array<i32>} : memref<8x32xf32, #tpu.memory_space<vmem>>, vector<8x32xf32>,
    return
  }
  func.func @transform_0(%arg0: i32) -> (i32, i32) {
    %c0_i32 = arith.constant 0 : i32
    %c0_i32_0 = arith.constant 0 : i32
    return %arg0, %c0_i32 : i32, i32
  }
  func.func @transform_1(%arg0: i32) -> (i32, i32) {
    %c0_i32 = arith.constant 0 : i32
    %c0_i32_0 = arith.constant 0 : i32
    return %arg0, %c0_i32 : i32, i32
  }
  func.func @transform_2(%arg0: i32) -> (i32, i32) {
    %c0_i32 = arith.constant 0 : i32
    %c0_i32_0 = arith.constant 0 : i32
    return %arg0, %c0_i32 : i32, i32
  }
  func.func @transform_3(%arg0: i32) -> (i32, i32) {
    %c0_i32 = arith.constant 0 : i32
    %c0_i32_0 = arith.constant 0 : i32
    %c0_i32_1 = arith.constant 0 : i32
    return %c0_i32, %c0_i32_0 : i32, i32
  }
  func.func @transform_4(%arg0: i32) -> (i32, i32) {
    %c0_i32 = arith.constant 0 : i32
    %c0_i32_0 = arith.constant 0 : i32
    %c0_i32_1 = arith.constant 0 : i32
    return %c0_i32, %c0_i32_0 : i32, i32
  }
  func.func @transform_5(%arg0: i32) -> (i32, i32) {
    %c0_i32 = arith.constant 0 : i32
    %c0_i32_0 = arith.constant 0 : i32
    %c0_i32_1 = arith.constant 0 : i32
    return %c0_i32, %c0_i32_0 : i32, i32
  }
  func.func @transform_6(%arg0: i32) -> (i32, i32) {
    %c0_i32 = arith.constant 0 : i32
    %c0_i32_0 = arith.constant 0 : i32
    %c0_i32_1 = arith.constant 0 : i32
    return %c0_i32, %c0_i32_0 : i32, i32
  }
  func.func @transform_7(%arg0: i32) -> (i32, i32) {
    %c0_i32 = arith.constant 0 : i32
    %c0_i32_0 = arith.constant 0 : i32
    return %arg0, %c0_i32 : i32, i32
  }
}

</mosaic_0001>

<llo_original>
// kernel: tpu_custom_call.1
$region0: #{tpu_custom_call.1}
  #allocation0 [shape = 'u32[]', space=smem, size = 0x4, offset = 0x4, fixed_abs, tag = 'smem constant byte address 0x4 - core index']
  #allocation1 [shape = 'u32[72,128]{1,0:T(1,128)}', space=vmem, size = 0x9000, scoped, tag = 'internal scratch']
  %s0 = inlined_call_operand.hbm [shape: f32[8,32], index: 0, kind: input, shape index: {}]
  %s1 = inlined_call_operand.hbm [shape: f32[8,32], index: 1, kind: input, shape index: {}]
  %s2 = inlined_call_operand.hbm [shape: f32[8,32], index: 2, kind: input, shape index: {}]
  %s3 = inlined_call_operand.hbm [shape: f32[32,64], index: 3, kind: input, shape index: {}]
  %s4 = inlined_call_operand.hbm [shape: f32[32,64], index: 4, kind: input, shape index: {}]
  %s5 = inlined_call_operand.hbm [shape: f32[32,64], index: 5, kind: input, shape index: {}]
  %s6 = inlined_call_operand.vmem [shape: f32[1,64], index: 6, kind: input, shape index: {}]
  %s7 = inlined_call_operand.hbm [shape: f32[8,32], index: 7, kind: output, shape index: {}]
  %s8 = sld [smem:[#allocation0]]
  $region62: #{tpu_custom_call.1} parent=0
    _
  %s10 = ssub.s32 1, %s8
  %s11 = scalar_select 0, %s10, %s8
  $region1: #{tpu_custom_call.1} parent=0
    #allocation2 [shape = 'u8[4096]{0}', space=vmem, size = 0x1000, scoped, tag = 'input window, operand 0, single buffered']
    #allocation3 [shape = 's32[1]{0}', space=sflag, size = 0x4, scoped, tag = 'scoped memory for tpu_custom_call.1']
    #allocation4 [shape = 's32[1]{0}', space=sflag, size = 0x4, scoped, tag = 'scoped memory for tpu_custom_call.1']
    #allocation5 [shape = 'u8[4096]{0}', space=vmem, size = 0x1000, scoped, tag = 'input window, operand 1, single buffered']
    #allocation6 [shape = 's32[1]{0}', space=sflag, size = 0x4, scoped, tag = 'scoped memory for tpu_custom_call.1']
    #allocation7 [shape = 'u8[4096]{0}', space=vmem, size = 0x1000, scoped, tag = 'input window, operand 2, single buffered']
    #allocation8 [shape = 'u8[16384]{0}', space=vmem, size = 0x4000, scoped, tag = 'input window, operand 3, single buffered']
    #allocation9 [shape = 's32[1]{0}', space=sflag, size = 0x4, scoped, tag = 'scoped memory for tpu_custom_call.1']
    #allocation10 [shape = 'u8[16384]{0}', space=vmem, size = 0x4000, scoped, tag = 'input window, operand 4, single buffered']
    #allocation11 [shape = 'u8[16384]{0}', space=vmem, size = 0x4000, scoped, tag = 'input window, operand 5, single buffered']
    #allocation12 [shape = 's32[1]{0}', space=sflag, size = 0x4, scoped, tag = 'scoped memory for tpu_custom_call.1']
    #allocation13 [shape = 'u8[4096]{0}', space=vmem, size = 0x1000, scoped, tag = 'output window, operand 0, single buffered']
    %12 = vsyncpa [#allocation3], 0
    %13 = vsyncpa [#allocation6], 0
    %14 = vsyncpa [#allocation9], 0
    %15 = vsyncpa [#allocation12], 0
    %16 = vsyncpa [#allocation4], 0
    // Predicated region
    $region2: #{tpu_custom_call.1} parent=1 // pred_check
      _
    $region3: #{tpu_custom_call.1} parent=1 // pred_check_branch
      %18 = sbr.rel (0) target = $region5
    $region4: #{tpu_custom_call.1} parent=1 // pred_region
      %20 = vsyncadd [#allocation3], 0
      %s22 = sshll.u32 %s0, 4
      %s23 = int_to_ptr.hbm [resolvable:$true] %s22
      %s24 = sshll.u32 [#allocation2], 4
      %s25 = int_to_ptr.vmem [resolvable:$true] %s24
      %27 = dma.hbm_to_vmem [thread:$0]  %s23, 128, %s25, [#allocation3]
    $region5: #{tpu_custom_call.1} parent=1 // pred_fallthru
      _
    // Predicated region
    $region6: #{tpu_custom_call.1} parent=1 // pred_check
      _
    $region7: #{tpu_custom_call.1} parent=1 // pred_check_branch
      %29 = sbr.rel (0) target = $region9
    $region8: #{tpu_custom_call.1} parent=1 // pred_region
      %31 = vsyncadd [#allocation6], 0
      %s33 = sshll.u32 %s1, 4
      %s34 = int_to_ptr.hbm [resolvable:$true] %s33
      %s35 = sshll.u32 [#allocation5], 4
      %s36 = int_to_ptr.vmem [resolvable:$true] %s35
      %38 = dma.hbm_to_vmem [thread:$0]  %s34, 128, %s36, [#allocation6]
    $region9: #{tpu_custom_call.1} parent=1 // pred_fallthru
      _
    // Predicated region
    $region10: #{tpu_custom_call.1} parent=1 // pred_check
      _
    $region11: #{tpu_custom_call.1} parent=1 // pred_check_branch
      %40 = sbr.rel (0) target = $region13
    $region12: #{tpu_custom_call.1} parent=1 // pred_region
      %42 = vsyncadd [#allocation6], 0
      %s44 = sshll.u32 %s2, 4
      %s45 = int_to_ptr.hbm [resolvable:$true] %s44
      %s46 = sshll.u32 [#allocation7], 4
      %s47 = int_to_ptr.vmem [resolvable:$true] %s46
      %49 = dma.hbm_to_vmem [thread:$0]  %s45, 128, %s47, [#allocation6]
    $region13: #{tpu_custom_call.1} parent=1 // pred_fallthru
      _
    // Predicated region
    $region14: #{tpu_custom_call.1} parent=1 // pred_check
      _
    $region15: #{tpu_custom_call.1} parent=1 // pred_check_branch
      %51 = sbr.rel (0) target = $region17
    $region16: #{tpu_custom_call.1} parent=1 // pred_region
      %53 = vsyncadd [#allocation9], 0
      %s54 = sshll.u32 %s3, 4
      %s55 = int_to_ptr.hbm [resolvable:$true] %s54
      %s56 = sshll.u32 [#allocation8], 4
      %s57 = int_to_ptr.vmem [resolvable:$true] %s56
      %62 = dma.hbm_to_vmem [thread:$0]  %s55, 512, %s57, [#allocation9], 128, 128, 8
    $region17: #{tpu_custom_call.1} parent=1 // pred_fallthru
      _
    // Predicated region
    $region18: #{tpu_custom_call.1} parent=1 // pred_check
      _
    $region19: #{tpu_custom_call.1} parent=1 // pred_check_branch
      %64 = sbr.rel (0) target = $region21
    $region20: #{tpu_custom_call.1} parent=1 // pred_region
      %66 = vsyncadd [#allocation9], 0
      %s67 = sshll.u32 %s4, 4
      %s68 = int_to_ptr.hbm [resolvable:$true] %s67
      %s69 = sshll.u32 [#allocation10], 4
      %s70 = int_to_ptr.vmem [resolvable:$true] %s69
      %75 = dma.hbm_to_vmem [thread:$0]  %s68, 512, %s70, [#allocation9], 128, 128, 8
    $region21: #{tpu_custom_call.1} parent=1 // pred_fallthru
      _
    // Predicated region
    $region22: #{tpu_custom_call.1} parent=1 // pred_check
      _
    $region23: #{tpu_custom_call.1} parent=1 // pred_check_branch
      %77 = sbr.rel (0) target = $region25
    $region24: #{tpu_custom_call.1} parent=1 // pred_region
      %79 = vsyncadd [#allocation12], 0
      %s80 = sshll.u32 %s5, 4
      %s81 = int_to_ptr.hbm [resolvable:$true] %s80
      %s82 = sshll.u32 [#allocation11], 4
      %s83 = int_to_ptr.vmem [resolvable:$true] %s82
      %88 = dma.hbm_to_vmem [thread:$0]  %s81, 512, %s83, [#allocation12], 128, 128, 8
    $region25: #{tpu_custom_call.1} parent=1 // pred_fallthru
      _
    // Predicated region
    $region26: #{tpu_custom_call.1} parent=1 // pred_check
      _
    $region27: #{tpu_custom_call.1} parent=1 // pred_check_branch
      %90 = sbr.rel (0) target = $region29
    $region28: #{tpu_custom_call.1} parent=1 // pred_region
      _
    $region29: #{tpu_custom_call.1} parent=1 // pred_fallthru
      _
    // Predicated region
    $region30: #{tpu_custom_call.1} parent=1 // pred_check
      _
    $region31: #{tpu_custom_call.1} parent=1 // pred_check_branch
      %92 = sbr.rel (0) target = $region33
    $region32: #{tpu_custom_call.1} parent=1 // pred_region
      %94 = dma.done [#allocation3], 128
    $region33: #{tpu_custom_call.1} parent=1 // pred_fallthru
      _
    // Predicated region
    $region34: #{tpu_custom_call.1} parent=1 // pred_check
      _
    $region35: #{tpu_custom_call.1} parent=1 // pred_check_branch
      %96 = sbr.rel (0) target = $region37
    $region36: #{tpu_custom_call.1} parent=1 // pred_region
      %98 = dma.done [#allocation6], 128
    $region37: #{tpu_custom_call.1} parent=1 // pred_fallthru
      _
    // Predicated region
    $region38: #{tpu_custom_call.1} parent=1 // pred_check
      _
    $region39: #{tpu_custom_call.1} parent=1 // pred_check_branch
      %100 = sbr.rel (0) target = $region41
    $region40: #{tpu_custom_call.1} parent=1 // pred_region
      %102 = dma.done [#allocation6], 128
    $region41: #{tpu_custom_call.1} parent=1 // pred_fallthru
      _
    // Predicated region
    $region42: #{tpu_custom_call.1} parent=1 // pred_check
      _
    $region43: #{tpu_custom_call.1} parent=1 // pred_check_branch
      %104 = sbr.rel (0) target = $region45
    $region44: #{tpu_custom_call.1} parent=1 // pred_region
      %106 = dma.done [#allocation9], 512
    $region45: #{tpu_custom_call.1} parent=1 // pred_fallthru
      _
    // Predicated region
    $region46: #{tpu_custom_call.1} parent=1 // pred_check
      _
    $region47: #{tpu_custom_call.1} parent=1 // pred_check_branch
      %108 = sbr.rel (0) target = $region49
    $region48: #{tpu_custom_call.1} parent=1 // pred_region
      %110 = dma.done [#allocation9], 512
    $region49: #{tpu_custom_call.1} parent=1 // pred_fallthru
      _
    // Predicated region
    $region50: #{tpu_custom_call.1} parent=1 // pred_check
      _
    $region51: #{tpu_custom_call.1} parent=1 // pred_check_branch
      %112 = sbr.rel (0) target = $region53
    $region52: #{tpu_custom_call.1} parent=1 // pred_region
      %114 = dma.done [#allocation12], 512
    $region53: #{tpu_custom_call.1} parent=1 // pred_fallthru
      _
    %v115 = vld [vmem:[#allocation2] sm:$0xff]
    %v116 = vld [vmem:[#allocation8] sm:$0xff]
    %v117 = vld [vmem:[#allocation8 + $0x8] sm:$0xff]
    %v118 = vld [vmem:[#allocation8 + $0x10] sm:$0xff]
    %v119 = vld [vmem:[#allocation8 + $0x18] sm:$0xff]
    %v120 = vld [vmem:[#allocation5] sm:$0xff]
    %v121 = vld [vmem:[#allocation10] sm:$0xff]
    %v122 = vld [vmem:[#allocation10 + $0x8] sm:$0xff]
    %v123 = vld [vmem:[#allocation10 + $0x10] sm:$0xff]
    %v124 = vld [vmem:[#allocation10 + $0x18] sm:$0xff]
    %vm125 = vcmask 261120
    %v127 = vsel %vm125, %v120, 0
    %129 = vmatpush.msra.mxu0 0.0
    %130 = vmatpush.msra.mxu0 0.0
    %131 = vmatpush.msra.mxu0 0.0
    %132 = vmatpush.msra.mxu0 0.0
    %133 = vmatpush.msra.mxu0 0.0
    %134 = vmatpush.msra.mxu0 0.0
    %135 = vmatpush.msra.mxu0 0.0
    %136 = vmatpush.msra.mxu0 0.0
    %137 = vmatpush.msra.mxu0 0.0
    %138 = vmatpush.msra.mxu0 0.0
    %139 = vmatpush.msra.mxu0 0.0
    %140 = vmatpush.msra.mxu0 0.0
    %141 = vmatpush.msra.mxu0 %v124
    %142 = vmatpush.msra.mxu0 %v123
    %143 = vmatpush.msra.mxu0 %v122
    %144 = vmatpush.msra.mxu0 %v121
    %145 = vmatmul.f32.gmra.mxu0 %v127
    %v146 = vpop.f32.mrf.mxu0
    %v147 = vadd.f32 0.0, %v146
    %148 = vdwg.mxu0
    %v150 = vsel %vm125, %v115, 0
    %152 = vmatpush.msra.mxu0 0.0
    %153 = vmatpush.msra.mxu0 0.0
    %154 = vmatpush.msra.mxu0 0.0
    %155 = vmatpush.msra.mxu0 0.0
    %156 = vmatpush.msra.mxu0 0.0
    %157 = vmatpush.msra.mxu0 0.0
    %158 = vmatpush.msra.mxu0 0.0
    %159 = vmatpush.msra.mxu0 0.0
    %160 = vmatpush.msra.mxu0 0.0
    %161 = vmatpush.msra.mxu0 0.0
    %162 = vmatpush.msra.mxu0 0.0
    %163 = vmatpush.msra.mxu0 0.0
    %164 = vmatpush.msra.mxu0 %v119
    %165 = vmatpush.msra.mxu0 %v118
    %166 = vmatpush.msra.mxu0 %v117
    %167 = vmatpush.msra.mxu0 %v116
    %168 = vmatmul.f32.gmra.mxu0 %v150
    %v169 = vpop.f32.mrf.mxu0
    %v170 = vadd.f32 %v147, %v169
    %171 = vdwg.mxu0
    %v172 = vld [vmem:[#allocation7] sm:$0xff]
    %v173 = vld [vmem:[#allocation11] sm:$0xff]
    %v174 = vld [vmem:[#allocation11 + $0x8] sm:$0xff]
    %v175 = vld [vmem:[#allocation11 + $0x10] sm:$0xff]
    %v176 = vld [vmem:[#allocation11 + $0x18] sm:$0xff]
    %v178 = vsel %vm125, %v172, 0
    %180 = vmatpush.msra.mxu0 0.0
    %181 = vmatpush.msra.mxu0 0.0
    %182 = vmatpush.msra.mxu0 0.0
    %183 = vmatpush.msra.mxu0 0.0
    %184 = vmatpush.msra.mxu0 0.0
    %185 = vmatpush.msra.mxu0 0.0
    %186 = vmatpush.msra.mxu0 0.0
    %187 = vmatpush.msra.mxu0 0.0
    %188 = vmatpush.msra.mxu0 0.0
    %189 = vmatpush.msra.mxu0 0.0
    %190 = vmatpush.msra.mxu0 0.0
    %191 = vmatpush.msra.mxu0 0.0
    %192 = vmatpush.msra.mxu0 %v176
    %193 = vmatpush.msra.mxu0 %v175
    %194 = vmatpush.msra.mxu0 %v174
    %195 = vmatpush.msra.mxu0 %v173
    %196 = vmatmul.f32.gmra.mxu0 %v178
    %v197 = vpop.f32.mrf.mxu0
    %v198 = vadd.f32 0.0, %v197
    %199 = vdwg.mxu0
    %v200 = vadd.f32 %v170, %v198
    %v201 = vld [vmem:[%s6] sm:$0x1]
    %v203 = vperm.slane %v201, 0
    %v205 = vadd.f32 %v200, %v203
    %v206 = vtanh.pop %v205
    %v207 = vxor.u32 %v205, 2147483648
    %v208 = vmul.f32 %v207, 1.442695
    %v209 = vpow.pop %v208
    %v210 = vadd.f32 %v209, 1.0
    %v211 = vrcp.pop %v210
    %v212 = vmul.f32 %v210, %v211
    %v213 = vsub.f32 1.0, %v212
    %v214 = vmul.f32 %v211, %v213
    %v215 = vadd.f32 %v211, %v214
    %vm216 = vweird.f32 %v210
    %vm217 = vweird.f32 %v211
    %vm218 = vmor %vm216, %vm217
    %v219 = vsel %vm218, %v211, %v215
    %v220 = vand.u32 2147483647, %v210
    %vm221 = vcmp.eq.f32.partialorder %v220, 8.507059e+37
    %v222 = vand.u32 %v210, 2147483648
    %v223 = vor.u32 1.1754944e-38, %v222
    %v224 = vsel %vm221, %v223, %v219
    %v225 = vmul.f32 1.0, %v224
    %227 = vrot.lane.b32.xlu0 %v225, 96
    %v228 = vpop.permute.xlu0 %227
    %v230 = vmul.f32 %v206, %v228
    %231 = vst.msk [vmem:[#allocation13] sm:$0xff] %vm125, %v230
    // Predicated region
    $region54: #{tpu_custom_call.1} parent=1 // pred_check
      _
    $region55: #{tpu_custom_call.1} parent=1 // pred_check_branch
      %233 = sbr.rel (0) target = $region57
    $region56: #{tpu_custom_call.1} parent=1 // pred_region
      %235 = vsyncadd [#allocation4], 0
      %s237 = sshll.u32 [#allocation13], 4
      %s238 = int_to_ptr.vmem [resolvable:$true] %s237
      %s239 = sshll.u32 %s7, 4
      %s240 = int_to_ptr.hbm [resolvable:$true] %s239
      %242 = dma.vmem_to_hbm [thread:$0]  %s238, 128, %s240, [#allocation4]
    $region57: #{tpu_custom_call.1} parent=1 // pred_fallthru
      _
    // Predicated region
    $region58: #{tpu_custom_call.1} parent=1 // pred_check
      _
    $region59: #{tpu_custom_call.1} parent=1 // pred_check_branch
      %244 = sbr.rel (0) target = $region61
    $region60: #{tpu_custom_call.1} parent=1 // pred_region
      %246 = dma.done [#allocation4], 128
    $region61: #{tpu_custom_call.1} parent=1 // pred_fallthru
      _
    %247 = vsyncpa [#allocation3], 1
    %248 = vsyncpa [#allocation6], 1
    %249 = vsyncpa [#allocation9], 1
    %250 = vsyncpa [#allocation12], 1
    %251 = vsyncpa [#allocation4], 1

</llo_original>
